<compile_context>
chip_gen: v7x
topology: tpu7x:2x2x1
jax: 0.10.0
libtpu: 0.0.40
codegen_flags: <defaults>
</compile_context>

<pallas_src>
import functools

import jax
import jax.numpy as jnp
from jax.experimental import pallas as pl
from jax.experimental.pallas import tpu as pltpu


def _round_up(x, m):
    return ((x + m - 1) // m) * m


def _pick_tile(dim, pref, granule):
    """Choose a tile size (multiple of `granule`) and the padded extent."""
    tile = pref if dim >= pref else _round_up(dim, granule)
    return tile, _round_up(dim, tile)


def _linear_kernel(x_ref, w_ref, b_ref, o_ref, acc_ref, *, apply_relu):
    """One (tm, tn) output tile of y = relu?(x @ w + b), accumulated over K tiles."""
    k = pl.program_id(2)

    @pl.when(k == 0)
    def _():
        acc_ref[...] = jnp.zeros_like(acc_ref)

    acc_ref[...] += jnp.dot(x_ref[...], w_ref[...],
                            preferred_element_type=jnp.float32)

    @pl.when(k == pl.num_programs(2) - 1)
    def _():
        y = acc_ref[...] + b_ref[...]          # bias add in f32
        if apply_relu:
            y = jnp.maximum(y, 0.0)            # ReLU in f32 on the accumulator
        o_ref[...] = y.astype(o_ref.dtype)


def _pallas_linear_padded(x_p, w_p, b_p, *, tm, tk, tn, apply_relu, out_dtype):
    """Tiled y = relu?(x @ w + b) on pre-padded operands.

    x_p: (Mp, Kp) bf16, w_p: (Kp, Np) bf16, b_p: (1, Np) f32; all dims divisible
    by their tiles.  Returns (Mp, Np) in `out_dtype`.
    """
    Mp, Kp = x_p.shape
    Kw, Np = w_p.shape
    assert Kp == Kw and b_p.shape == (1, Np)
    assert Mp % tm == 0 and Kp % tk == 0 and Np % tn == 0

    grid = (Mp // tm, Np // tn, Kp // tk)

    return pl.pallas_call(
        functools.partial(_linear_kernel, apply_relu=apply_relu),
        out_shape=jax.ShapeDtypeStruct((Mp, Np), out_dtype),
        grid_spec=pltpu.PrefetchScalarGridSpec(
            num_scalar_prefetch=0,
            grid=grid,
            in_specs=[
                pl.BlockSpec((tm, tk), lambda i, j, k: (i, k)),
                pl.BlockSpec((tk, tn), lambda i, j, k: (k, j)),
                pl.BlockSpec((1, tn), lambda i, j, k: (0, j)),   # resident across k
            ],
            out_specs=pl.BlockSpec((tm, tn), lambda i, j, k: (i, j)),
            scratch_shapes=[pltpu.VMEM((tm, tn), jnp.float32)],
        ),
        compiler_params=pltpu.CompilerParams(
            dimension_semantics=("parallel", "parallel", "arbitrary"),
            vmem_limit_bytes=40 << 20,   # v7x-safe; could be raised on v5e/v6e
        ),
    )(x_p, w_p, b_p)


def prepare_bbox_head_params(params, *, tk_pref=1024, tn_pref=1024):
    """One-time prep: fuse heads, pad to tile granularity, cast weights to bf16.

    Returns (arrays, meta) where `arrays` holds padded bf16 weights / padded f32
    biases and `meta` holds the static dims / tile sizes used by the forward.
    """
    w1, b1, w2, b2, wc, bc, wr, br = params
    in_features, hidden = w1.shape
    num_classes = wc.shape[1]

    # Fuse the two small heads into one lane-dense matmul (hoisted out of forward).
    wh = jnp.concatenate([wc, wr], axis=1)
    bh = jnp.concatenate([bc, br], axis=1)
    n_heads = wh.shape[1]

    tk1, Kp1 = _pick_tile(in_features, tk_pref, 128)     # layer-1 reduction dim
    th, Hp = _pick_tile(hidden, tn_pref, 128)            # hidden as N (l1) and K/N (l2)
    th_k, Hp_k = _pick_tile(hidden, tk_pref, 128)
    assert th == th_k and Hp == Hp_k                     # tn_pref == tk_pref keeps these equal
    tno, Np_o = _pick_tile(n_heads, tn_pref, 128)        # fused head output width

    def pad_w(w, kp, np_):
        k, n = w.shape
        return jnp.pad(w, ((0, kp - k), (0, np_ - n))).astype(jnp.bfloat16)

    def pad_b(b, np_):
        return jnp.pad(b, ((0, 0), (0, np_ - b.shape[1]))).astype(jnp.float32)

    arrays = dict(
        w1=pad_w(w1, Kp1, Hp), b1=pad_b(b1, Hp),
        w2=pad_w(w2, Hp, Hp),  b2=pad_b(b2, Hp),
        wh=pad_w(wh, Hp, Np_o), bh=pad_b(bh, Np_o),
    )
    meta = dict(in_features=in_features, hidden=hidden, num_classes=num_classes,
                n_heads=n_heads, Kp1=Kp1, Hp=Hp, Np_o=Np_o,
                tk1=tk1, th=th, tno=tno)
    return arrays, meta


def bbox_head_forward(features, arrays, meta, *, tm_pref=1024):
    """features: (N, C, H, W) float32 (NCHW). Returns (cls_scores, reg_scores)."""
    n = features.shape[0]
    x = features.reshape(n, -1)          # == features.view(features.size(0), -1)
    assert x.shape[1] == meta["in_features"]

    # Pad the RoI dim once (granule 16 for bf16 sublane packing); a single row
    # tile covers all RoIs for M <= 1024, so weights stream from HBM only once.
    tm, Mp = _pick_tile(n, tm_pref, 16)
    x_p = jnp.pad(x, ((0, Mp - n), (0, meta["Kp1"] - x.shape[1]))).astype(jnp.bfloat16)

    # shared_layers: Linear -> ReLU -> (Dropout=id) -> Linear -> ReLU -> (Dropout=id)
    h1 = _pallas_linear_padded(x_p, arrays["w1"], arrays["b1"],
                               tm=tm, tk=meta["tk1"], tn=meta["th"],
                               apply_relu=True, out_dtype=jnp.bfloat16)
    h2 = _pallas_linear_padded(h1, arrays["w2"], arrays["b2"],
                               tm=tm, tk=meta["th"], tn=meta["th"],
                               apply_relu=True, out_dtype=jnp.bfloat16)

    # Fused cls/reg heads (lane-dense, output width padded to 128 lanes).
    out = _pallas_linear_padded(h2, arrays["wh"], arrays["bh"],
                                tm=tm, tk=meta["th"], tn=meta["tno"],
                                apply_relu=False, out_dtype=jnp.float32)

    out = out[:n]                         # slice the padded M dim exactly once
    nc = meta["num_classes"]
    cls_scores = out[:, :nc]
    reg_scores = out[:, nc:meta["n_heads"]]
    return cls_scores, reg_scores


def init_params(key, in_features, hidden, num_classes):
    """Deterministic synthetic init (stand-in for load_vgg_fc)."""
    ks = jax.random.split(key, 8)
    scale = 0.02

    def lin(kw, kb, fan_in, fan_out):
        w = (scale * jax.random.normal(kw, (fan_in, fan_out))).astype(jnp.float32)
        b = (scale * jax.random.normal(kb, (1, fan_out))).astype(jnp.float32)
        return w, b

    w1, b1 = lin(ks[0], ks[1], in_features, hidden)
    w2, b2 = lin(ks[2], ks[3], hidden, hidden)
    wc, bc = lin(ks[4], ks[5], hidden, num_classes)
    wr, br = lin(ks[6], ks[7], hidden, num_classes * 4)
    return (w1, b1, w2, b2, wc, bc, wr, br)


def reference_forward(features, params):
    """Mixed-precision reference mirroring the kernel pipeline
    (bf16 operands, f32 accumulation, bf16 intermediates)."""
    n = features.shape[0]
    x = features.reshape(n, -1).astype(jnp.bfloat16)
    w1, b1, w2, b2, wc, bc, wr, br = params

    def lin(a, w, b):
        return jnp.dot(a, w.astype(jnp.bfloat16),
                       preferred_element_type=jnp.float32) + b

    h1 = jnp.maximum(lin(x, w1, b1), 0.0).astype(jnp.bfloat16)
    h2 = jnp.maximum(lin(h1, w2, b2), 0.0).astype(jnp.bfloat16)
    return lin(h2, wc, bc), lin(h2, wr, br)


if __name__ == "__main__":
    # Small shapes consistent with the head: RoI feature map (N, C, 7, 7),
    # flattened to C*7*7 features. (Real VGG head: C=512, hidden=4096; the
    # same kernels then use tm=min(M,1024), tk=tn=1024 tiles, streaming each
    # weight once per forward.)
    N, C, H, W = 2, 8, 7, 7
    HIDDEN = 256
    NUM_CLASSES = 5

    key = jax.random.PRNGKey(0)
    k_feat, k_param = jax.random.split(key)

    features = jax.random.normal(k_feat, (N, C, H, W), dtype=jnp.float32)
    params = init_params(k_param, C * H * W, HIDDEN, NUM_CLASSES)

    # One-time weight prep (pad + bf16 cast + head fusion) outside the forward.
    arrays, meta = prepare_bbox_head_params(params)

    fwd = jax.jit(lambda f, a: bbox_head_forward(f, a, meta))
    cls_scores, reg_scores = fwd(features, arrays)
    cls_scores = jax.block_until_ready(cls_scores)
    reg_scores = jax.block_until_ready(reg_scores)

    ref_cls, ref_reg = reference_forward(features, params)
    assert cls_scores.shape == (N, NUM_CLASSES)
    assert reg_scores.shape == (N, NUM_CLASSES * 4)
    assert jnp.allclose(cls_scores, ref_cls, atol=1e-3, rtol=1e-2)
    assert jnp.allclose(reg_scores, ref_reg, atol=1e-3, rtol=1e-2)

    print("KERNEL_OK")
</pallas_src>

<mosaic_0001>
module attributes {stable_mosaic.version = 11 : i64} {
  func.func @_linear_kernel(%arg0: i32, %arg1: i32, %arg2: i32, %arg3: memref<16x256xbf16, #tpu.memory_space<vmem>>, %arg4: memref<256x256xbf16, #tpu.memory_space<vmem>>, %arg5: memref<1x256xf32, #tpu.memory_space<vmem>>, %arg6: memref<16x256xbf16, #tpu.memory_space<vmem>>, %arg7: memref<16x256xf32, #tpu.memory_space<vmem>>) attributes {dimension_semantics = [#tpu.dimension_semantics<parallel>, #tpu.dimension_semantics<parallel>, #tpu.dimension_semantics<arbitrary>], iteration_bounds = array<i64: 1, 1, 1>, scalar_prefetch = 0 : i64, scratch_operands = 1 : i64, tpu.core_type = #tpu.core_type<tc>, window_params = [{transform_indices = @transform_0, window_bounds = array<i64: 16, 256>}, {transform_indices = @transform_1, window_bounds = array<i64: 256, 256>}, {transform_indices = @transform_2, window_bounds = array<i64: 1, 256>}, {transform_indices = @transform_3, window_bounds = array<i64: 16, 256>}]} {
    %c0_i32 = arith.constant 0 : i32
    %0 = arith.cmpi eq, %arg2, %c0_i32 : i32
    %1 = arith.extui %0 : i1 to i32
    %c0_i32_0 = arith.constant 0 : i32
    %2 = arith.cmpi ne, %1, %c0_i32_0 : i32
    scf.if %2 {
      %cst_10 = arith.constant 0.000000e+00 : f32
      %12 = vector.broadcast %cst_10 : f32 to vector<16x256xf32>
      %c0_11 = arith.constant 0 : index
      %c0_12 = arith.constant 0 : index
      %13 = vector.load %arg7[%c0_11, %c0_12] : memref<16x256xf32, #tpu.memory_space<vmem>>, vector<16x256xf32>
      tpu.vector_store %arg7[%c0_11, %c0_12], %12 {strides = array<i32>} : memref<16x256xf32, #tpu.memory_space<vmem>>, vector<16x256xf32>,
    } else {
    }
    %c0 = arith.constant 0 : index
    %c0_1 = arith.constant 0 : index
    %3 = vector.load %arg7[%c0, %c0_1] : memref<16x256xf32, #tpu.memory_space<vmem>>, vector<16x256xf32>
    %c0_2 = arith.constant 0 : index
    %c0_3 = arith.constant 0 : index
    %4 = vector.load %arg3[%c0_2, %c0_3] : memref<16x256xbf16, #tpu.memory_space<vmem>>, vector<16x256xbf16>
    %c0_4 = arith.constant 0 : index
    %c0_5 = arith.constant 0 : index
    %5 = vector.load %arg4[%c0_4, %c0_5] : memref<256x256xbf16, #tpu.memory_space<vmem>>, vector<256x256xbf16>
    %cst = arith.constant dense<0.000000e+00> : vector<16x256xf32>
    %6 = tpu.matmul %4, %5, %cst {dimension_numbers = #tpu.dot_dimension_numbers<[1], [0], [0], [1], [0, 0, 1, 1], [], []>} : vector<16x256xbf16>, vector<256x256xbf16>, vector<16x256xf32> -> vector<16x256xf32>
    %7 = arith.addf %3, %6 : vector<16x256xf32>
    %c0_6 = arith.constant 0 : index
    %c0_7 = arith.constant 0 : index
    %8 = vector.load %arg7[%c0_6, %c0_7] : memref<16x256xf32, #tpu.memory_space<vmem>>, vector<16x256xf32>
    tpu.vector_store %arg7[%c0_6, %c0_7], %7 {strides = array<i32>} : memref<16x256xf32, #tpu.memory_space<vmem>>, vector<16x256xf32>,
    %c0_i32_8 = arith.constant 0 : i32
    %9 = arith.cmpi eq, %arg2, %c0_i32_8 : i32
    %10 = arith.extui %9 : i1 to i32
    %c0_i32_9 = arith.constant 0 : i32
    %11 = arith.cmpi ne, %10, %c0_i32_9 : i32
    scf.if %11 {
      %c0_10 = arith.constant 0 : index
      %c0_11 = arith.constant 0 : index
      %12 = vector.load %arg7[%c0_10, %c0_11] : memref<16x256xf32, #tpu.memory_space<vmem>>, vector<16x256xf32>
      %c0_12 = arith.constant 0 : index
      %c0_13 = arith.constant 0 : index
      %13 = vector.load %arg5[%c0_12, %c0_13] : memref<1x256xf32, #tpu.memory_space<vmem>>, vector<1x256xf32>
      %14 = vector.broadcast %13 : vector<1x256xf32> to vector<16x256xf32>
      %15 = arith.addf %12, %14 : vector<16x256xf32>
      %cst_14 = arith.constant 0.000000e+00 : f32
      %16 = vector.broadcast %cst_14 : f32 to vector<16x256xf32>
      %17 = arith.maximumf %15, %16 : vector<16x256xf32>
      %18 = arith.truncf %17 : vector<16x256xf32> to vector<16x256xbf16>
      %c0_15 = arith.constant 0 : index
      %c0_16 = arith.constant 0 : index
      %19 = vector.load %arg6[%c0_15, %c0_16] : memref<16x256xbf16, #tpu.memory_space<vmem>>, vector<16x256xbf16>
      tpu.vector_store %arg6[%c0_15, %c0_16], %18 {strides = array<i32>} : memref<16x256xbf16, #tpu.memory_space<vmem>>, vector<16x256xbf16>,
    } else {
    }
    return
  }
  func.func @transform_0(%arg0: i32, %arg1: i32, %arg2: i32) -> (i32, i32) {
    %c0_i32 = arith.constant 0 : i32
    return %arg0, %arg2 : i32, i32
  }
  func.func @transform_1(%arg0: i32, %arg1: i32, %arg2: i32) -> (i32, i32) {
    %c0_i32 = arith.constant 0 : i32
    return %arg2, %arg1 : i32, i32
  }
  func.func @transform_2(%arg0: i32, %arg1: i32, %arg2: i32) -> (i32, i32) {
    %c0_i32 = arith.constant 0 : i32
    %c0_i32_0 = arith.constant 0 : i32
    return %c0_i32, %arg1 : i32, i32
  }
  func.func @transform_3(%arg0: i32, %arg1: i32, %arg2: i32) -> (i32, i32) {
    %c0_i32 = arith.constant 0 : i32
    return %arg0, %arg1 : i32, i32
  }
}

module attributes {stable_mosaic.version = 11 : i64} {
  func.func @_linear_kernel(%arg0: i32, %arg1: i32, %arg2: i32, %arg3: memref<16x512xbf16, #tpu.memory_space<vmem>>, %arg4: memref<512x256xbf16, #tpu.memory_space<vmem>>, %arg5: memref<1x256xf32, #tpu.memory_space<vmem>>, %arg6: memref<16x256xbf16, #tpu.memory_space<vmem>>, %arg7: memref<16x256xf32, #tpu.memory_space<vmem>>) attributes {dimension_semantics = [#tpu.dimension_semantics<parallel>, #tpu.dimension_semantics<parallel>, #tpu.dimension_semantics<arbitrary>], iteration_bounds = array<i64: 1, 1, 1>, scalar_prefetch = 0 : i64, scratch_operands = 1 : i64, tpu.core_type = #tpu.core_type<tc>, window_params = [{transform_indices = @transform_0, window_bounds = array<i64: 16, 512>}, {transform_indices = @transform_1, window_bounds = array<i64: 512, 256>}, {transform_indices = @transform_2, window_bounds = array<i64: 1, 256>}, {transform_indices = @transform_3, window_bounds = array<i64: 16, 256>}]} {
    %c0_i32 = arith.constant 0 : i32
    %0 = arith.cmpi eq, %arg2, %c0_i32 : i32
    %1 = arith.extui %0 : i1 to i32
    %c0_i32_0 = arith.constant 0 : i32
    %2 = arith.cmpi ne, %1, %c0_i32_0 : i32
    scf.if %2 {
      %cst_10 = arith.constant 0.000000e+00 : f32
      %12 = vector.broadcast %cst_10 : f32 to vector<16x256xf32>
      %c0_11 = arith.constant 0 : index
      %c0_12 = arith.constant 0 : index
      %13 = vector.load %arg7[%c0_11, %c0_12] : memref<16x256xf32, #tpu.memory_space<vmem>>, vector<16x256xf32>
      tpu.vector_store %arg7[%c0_11, %c0_12], %12 {strides = array<i32>} : memref<16x256xf32, #tpu.memory_space<vmem>>, vector<16x256xf32>,
    } else {
    }
    %c0 = arith.constant 0 : index
    %c0_1 = arith.constant 0 : index
    %3 = vector.load %arg7[%c0, %c0_1] : memref<16x256xf32, #tpu.memory_space<vmem>>, vector<16x256xf32>
    %c0_2 = arith.constant 0 : index
    %c0_3 = arith.constant 0 : index
    %4 = vector.load %arg3[%c0_2, %c0_3] : memref<16x512xbf16, #tpu.memory_space<vmem>>, vector<16x512xbf16>
    %c0_4 = arith.constant 0 : index
    %c0_5 = arith.constant 0 : index
    %5 = vector.load %arg4[%c0_4, %c0_5] : memref<512x256xbf16, #tpu.memory_space<vmem>>, vector<512x256xbf16>
    %cst = arith.constant dense<0.000000e+00> : vector<16x256xf32>
    %6 = tpu.matmul %4, %5, %cst {dimension_numbers = #tpu.dot_dimension_numbers<[1], [0], [0], [1], [0, 0, 1, 1], [], []>} : vector<16x512xbf16>, vector<512x256xbf16>, vector<16x256xf32> -> vector<16x256xf32>
    %7 = arith.addf %3, %6 : vector<16x256xf32>
    %c0_6 = arith.constant 0 : index
    %c0_7 = arith.constant 0 : index
    %8 = vector.load %arg7[%c0_6, %c0_7] : memref<16x256xf32, #tpu.memory_space<vmem>>, vector<16x256xf32>
    tpu.vector_store %arg7[%c0_6, %c0_7], %7 {strides = array<i32>} : memref<16x256xf32, #tpu.memory_space<vmem>>, vector<16x256xf32>,
    %c0_i32_8 = arith.constant 0 : i32
    %9 = arith.cmpi eq, %arg2, %c0_i32_8 : i32
    %10 = arith.extui %9 : i1 to i32
    %c0_i32_9 = arith.constant 0 : i32
    %11 = arith.cmpi ne, %10, %c0_i32_9 : i32
    scf.if %11 {
      %c0_10 = arith.constant 0 : index
      %c0_11 = arith.constant 0 : index
      %12 = vector.load %arg7[%c0_10, %c0_11] : memref<16x256xf32, #tpu.memory_space<vmem>>, vector<16x256xf32>
      %c0_12 = arith.constant 0 : index
      %c0_13 = arith.constant 0 : index
      %13 = vector.load %arg5[%c0_12, %c0_13] : memref<1x256xf32, #tpu.memory_space<vmem>>, vector<1x256xf32>
      %14 = vector.broadcast %13 : vector<1x256xf32> to vector<16x256xf32>
      %15 = arith.addf %12, %14 : vector<16x256xf32>
      %cst_14 = arith.constant 0.000000e+00 : f32
      %16 = vector.broadcast %cst_14 : f32 to vector<16x256xf32>
      %17 = arith.maximumf %15, %16 : vector<16x256xf32>
      %18 = arith.truncf %17 : vector<16x256xf32> to vector<16x256xbf16>
      %c0_15 = arith.constant 0 : index
      %c0_16 = arith.constant 0 : index
      %19 = vector.load %arg6[%c0_15, %c0_16] : memref<16x256xbf16, #tpu.memory_space<vmem>>, vector<16x256xbf16>
      tpu.vector_store %arg6[%c0_15, %c0_16], %18 {strides = array<i32>} : memref<16x256xbf16, #tpu.memory_space<vmem>>, vector<16x256xbf16>,
    } else {
    }
    return
  }
  func.func @transform_0(%arg0: i32, %arg1: i32, %arg2: i32) -> (i32, i32) {
    %c0_i32 = arith.constant 0 : i32
    return %arg0, %arg2 : i32, i32
  }
  func.func @transform_1(%arg0: i32, %arg1: i32, %arg2: i32) -> (i32, i32) {
    %c0_i32 = arith.constant 0 : i32
    return %arg2, %arg1 : i32, i32
  }
  func.func @transform_2(%arg0: i32, %arg1: i32, %arg2: i32) -> (i32, i32) {
    %c0_i32 = arith.constant 0 : i32
    %c0_i32_0 = arith.constant 0 : i32
    return %c0_i32, %arg1 : i32, i32
  }
  func.func @transform_3(%arg0: i32, %arg1: i32, %arg2: i32) -> (i32, i32) {
    %c0_i32 = arith.constant 0 : i32
    return %arg0, %arg1 : i32, i32
  }
}

module attributes {stable_mosaic.version = 11 : i64} {
  func.func @_linear_kernel(%arg0: i32, %arg1: i32, %arg2: i32, %arg3: memref<16x256xbf16, #tpu.memory_space<vmem>>, %arg4: memref<256x128xbf16, #tpu.memory_space<vmem>>, %arg5: memref<1x128xf32, #tpu.memory_space<vmem>>, %arg6: memref<16x128xf32, #tpu.memory_space<vmem>>, %arg7: memref<16x128xf32, #tpu.memory_space<vmem>>) attributes {dimension_semantics = [#tpu.dimension_semantics<parallel>, #tpu.dimension_semantics<parallel>, #tpu.dimension_semantics<arbitrary>], iteration_bounds = array<i64: 1, 1, 1>, scalar_prefetch = 0 : i64, scratch_operands = 1 : i64, tpu.core_type = #tpu.core_type<tc>, window_params = [{transform_indices = @transform_0, window_bounds = array<i64: 16, 256>}, {transform_indices = @transform_1, window_bounds = array<i64: 256, 128>}, {transform_indices = @transform_2, window_bounds = array<i64: 1, 128>}, {transform_indices = @transform_3, window_bounds = array<i64: 16, 128>}]} {
    %c0_i32 = arith.constant 0 : i32
    %0 = arith.cmpi eq, %arg2, %c0_i32 : i32
    %1 = arith.extui %0 : i1 to i32
    %c0_i32_0 = arith.constant 0 : i32
    %2 = arith.cmpi ne, %1, %c0_i32_0 : i32
    scf.if %2 {
      %cst_10 = arith.constant 0.000000e+00 : f32
      %12 = vector.broadcast %cst_10 : f32 to vector<16x128xf32>
      %c0_11 = arith.constant 0 : index
      %c0_12 = arith.constant 0 : index
      %13 = vector.load %arg7[%c0_11, %c0_12] : memref<16x128xf32, #tpu.memory_space<vmem>>, vector<16x128xf32>
      tpu.vector_store %arg7[%c0_11, %c0_12], %12 {strides = array<i32>} : memref<16x128xf32, #tpu.memory_space<vmem>>, vector<16x128xf32>,
    } else {
    }
    %c0 = arith.constant 0 : index
    %c0_1 = arith.constant 0 : index
    %3 = vector.load %arg7[%c0, %c0_1] : memref<16x128xf32, #tpu.memory_space<vmem>>, vector<16x128xf32>
    %c0_2 = arith.constant 0 : index
    %c0_3 = arith.constant 0 : index
    %4 = vector.load %arg3[%c0_2, %c0_3] : memref<16x256xbf16, #tpu.memory_space<vmem>>, vector<16x256xbf16>
    %c0_4 = arith.constant 0 : index
    %c0_5 = arith.constant 0 : index
    %5 = vector.load %arg4[%c0_4, %c0_5] : memref<256x128xbf16, #tpu.memory_space<vmem>>, vector<256x128xbf16>
    %cst = arith.constant dense<0.000000e+00> : vector<16x128xf32>
    %6 = tpu.matmul %4, %5, %cst {dimension_numbers = #tpu.dot_dimension_numbers<[1], [0], [0], [1], [0, 0, 1, 1], [], []>} : vector<16x256xbf16>, vector<256x128xbf16>, vector<16x128xf32> -> vector<16x128xf32>
    %7 = arith.addf %3, %6 : vector<16x128xf32>
    %c0_6 = arith.constant 0 : index
    %c0_7 = arith.constant 0 : index
    %8 = vector.load %arg7[%c0_6, %c0_7] : memref<16x128xf32, #tpu.memory_space<vmem>>, vector<16x128xf32>
    tpu.vector_store %arg7[%c0_6, %c0_7], %7 {strides = array<i32>} : memref<16x128xf32, #tpu.memory_space<vmem>>, vector<16x128xf32>,
    %c0_i32_8 = arith.constant 0 : i32
    %9 = arith.cmpi eq, %arg2, %c0_i32_8 : i32
    %10 = arith.extui %9 : i1 to i32
    %c0_i32_9 = arith.constant 0 : i32
    %11 = arith.cmpi ne, %10, %c0_i32_9 : i32
    scf.if %11 {
      %c0_10 = arith.constant 0 : index
      %c0_11 = arith.constant 0 : index
      %12 = vector.load %arg7[%c0_10, %c0_11] : memref<16x128xf32, #tpu.memory_space<vmem>>, vector<16x128xf32>
      %c0_12 = arith.constant 0 : index
      %c0_13 = arith.constant 0 : index
      %13 = vector.load %arg5[%c0_12, %c0_13] : memref<1x128xf32, #tpu.memory_space<vmem>>, vector<1x128xf32>
      %14 = vector.broadcast %13 : vector<1x128xf32> to vector<16x128xf32>
      %15 = arith.addf %12, %14 : vector<16x128xf32>
      %c0_14 = arith.constant 0 : index
      %c0_15 = arith.constant 0 : index
      %16 = vector.load %arg6[%c0_14, %c0_15] : memref<16x128xf32, #tpu.memory_space<vmem>>, vector<16x128xf32>
      tpu.vector_store %arg6[%c0_14, %c0_15], %15 {strides = array<i32>} : memref<16x128xf32, #tpu.memory_space<vmem>>, vector<16x128xf32>,
    } else {
    }
    return
  }
  func.func @transform_0(%arg0: i32, %arg1: i32, %arg2: i32) -> (i32, i32) {
    %c0_i32 = arith.constant 0 : i32
    return %arg0, %arg2 : i32, i32
  }
  func.func @transform_1(%arg0: i32, %arg1: i32, %arg2: i32) -> (i32, i32) {
    %c0_i32 = arith.constant 0 : i32
    return %arg2, %arg1 : i32, i32
  }
  func.func @transform_2(%arg0: i32, %arg1: i32, %arg2: i32) -> (i32, i32) {
    %c0_i32 = arith.constant 0 : i32
    %c0_i32_0 = arith.constant 0 : i32
    return %c0_i32, %arg1 : i32, i32
  }
  func.func @transform_3(%arg0: i32, %arg1: i32, %arg2: i32) -> (i32, i32) {
    %c0_i32 = arith.constant 0 : i32
    return %arg0, %arg1 : i32, i32
  }
}

</mosaic_0001>

<llo_original>
// kernel: _lambda_.5
$region0: #{_lambda_.5}
  #allocation0 [shape = 'u32[]', space=smem, size = 0x4, offset = 0x4, fixed_abs, tag = 'smem constant byte address 0x4 - core index']
  #allocation1 [shape = 'u32[144,128]{1,0:T(1,128)}', space=vmem, size = 0x12000, scoped, tag = 'internal scratch']
  #allocation2 [shape = 'f32[16,128]{1,0:T(8,128)}', space=vmem, size = 0x2000, scoped, tag = 'scratch operand']
  %s0 = inlined_call_operand.vmem [shape: bf16[16,256], index: 0, kind: input, shape index: {}]
  %s1 = inlined_call_operand.vmem [shape: bf16[256,128], index: 1, kind: input, shape index: {}]
  %s2 = inlined_call_operand.vmem [shape: f32[1,128], index: 2, kind: input, shape index: {}]
  %s3 = inlined_call_operand.vmem [shape: f32[16,128], index: 3, kind: output, shape index: {}]
  %s4 = sld [smem:[#allocation0]]
  $region30: #{_lambda_.5} parent=0
    _
  %s6 = ssub.s32 1, %s4
  %s7 = scalar_select 0, %s6, %s4
  // Predicated region
  $region2: #{_lambda_.5} parent=0 // pred_check
    _
  $region3: #{_lambda_.5} parent=0 // pred_check_branch
    %9 = sbr.rel (0) target = $region5
  $region4: #{_lambda_.5} parent=0 // pred_region
    _
  $region5: #{_lambda_.5} parent=0 // pred_fallthru
    _
  // Predicated region
  $region6: #{_lambda_.5} parent=0 // pred_check
    _
  $region7: #{_lambda_.5} parent=0 // pred_check_branch
    %11 = sbr.rel (0) target = $region9
  $region8: #{_lambda_.5} parent=0 // pred_region
    _
  $region9: #{_lambda_.5} parent=0 // pred_fallthru
    _
  // Predicated region
  $region10: #{_lambda_.5} parent=0 // pred_check
    _
  $region11: #{_lambda_.5} parent=0 // pred_check_branch
    %13 = sbr.rel (0) target = $region13
  $region12: #{_lambda_.5} parent=0 // pred_region
    _
  $region13: #{_lambda_.5} parent=0 // pred_fallthru
    _
  %p15 = scmp.eq.s32.totalorder 0, 0
  // Predicated region
  $region14: #{_lambda_.5} parent=0 // pred_check
    %p16 = pneg %p15
  $region15: #{_lambda_.5} parent=0 // pred_check_branch
    %18 = sbr.rel (%p16) target = $region17
  $region16: #{_lambda_.5} parent=0 // pred_region
    %19 = vst [vmem:[#allocation2] sm:$0xff] 0.0
    %20 = vst [vmem:[#allocation2 + $0x8] sm:$0xff] 0.0
  $region17: #{_lambda_.5} parent=0 // pred_fallthru
    _
  %v21 = vld [vmem:[#allocation2] sm:$0xff]
  %v22 = vld [vmem:[#allocation2 + $0x8] sm:$0xff]
  %v23 = vld [vmem:[%s0] sm:$0xff]
  %v24 = vld [vmem:[%s0 + $0x8] sm:$0xff]
  %v25 = vld [vmem:[%s1] sm:$0xf]
  %v26 = vld [vmem:[%s1 + $0x4] sm:$0xf]
  %v27 = vld [vmem:[%s1 + $0x8] sm:$0xf]
  %v28 = vld [vmem:[%s1 + $0xc] sm:$0xf]
  %v29 = vld [vmem:[%s1 + $0x10] sm:$0xf]
  %v30 = vld [vmem:[%s1 + $0x14] sm:$0xf]
  %v31 = vld [vmem:[%s1 + $0x18] sm:$0xf]
  %v32 = vld [vmem:[%s1 + $0x1c] sm:$0xf]
  %v33 = vld [vmem:[%s1 + $0x20] sm:$0xf]
  %v34 = vld [vmem:[%s1 + $0x24] sm:$0xf]
  %v35 = vld [vmem:[%s1 + $0x28] sm:$0xf]
  %v36 = vld [vmem:[%s1 + $0x2c] sm:$0xf]
  %v37 = vld [vmem:[%s1 + $0x30] sm:$0xf]
  %v38 = vld [vmem:[%s1 + $0x34] sm:$0xf]
  %v39 = vld [vmem:[%s1 + $0x38] sm:$0xf]
  %v40 = vld [vmem:[%s1 + $0x3c] sm:$0xf]
  %v41 = vld [vmem:[%s1 + $0x40] sm:$0xf]
  %v42 = vld [vmem:[%s1 + $0x44] sm:$0xf]
  %v43 = vld [vmem:[%s1 + $0x48] sm:$0xf]
  %v44 = vld [vmem:[%s1 + $0x4c] sm:$0xf]
  %v45 = vld [vmem:[%s1 + $0x50] sm:$0xf]
  %v46 = vld [vmem:[%s1 + $0x54] sm:$0xf]
  %v47 = vld [vmem:[%s1 + $0x58] sm:$0xf]
  %v48 = vld [vmem:[%s1 + $0x5c] sm:$0xf]
  %v49 = vld [vmem:[%s1 + $0x60] sm:$0xf]
  %v50 = vld [vmem:[%s1 + $0x64] sm:$0xf]
  %v51 = vld [vmem:[%s1 + $0x68] sm:$0xf]
  %v52 = vld [vmem:[%s1 + $0x6c] sm:$0xf]
  %v53 = vld [vmem:[%s1 + $0x70] sm:$0xf]
  %v54 = vld [vmem:[%s1 + $0x74] sm:$0xf]
  %v55 = vld [vmem:[%s1 + $0x78] sm:$0xf]
  %v56 = vld [vmem:[%s1 + $0x7c] sm:$0xf]
  %v59 = vunpack.c.l.b16 %v23
  %v60 = vunpack.c.h.b16 %v23
  %v61 = vunpack.c.l.b16 %v24
  %v62 = vunpack.c.h.b16 %v24
  %v63 = vpack.c.b16 %v61, %v59
  %v64 = vpack.c.b16 %v62, %v60
  %v99 = vunpack.c.l.b16 %v25
  %v100 = vunpack.c.l.b16 %v26
  %v101 = vunpack.c.l.b16 %v27
  %v102 = vunpack.c.l.b16 %v28
  %v103 = vunpack.c.l.b16 %v29
  %v104 = vunpack.c.l.b16 %v30
  %v105 = vunpack.c.l.b16 %v31
  %v106 = vunpack.c.l.b16 %v32
  %v107 = vunpack.c.l.b16 %v33
  %v108 = vunpack.c.l.b16 %v34
  %v109 = vunpack.c.l.b16 %v35
  %v110 = vunpack.c.l.b16 %v36
  %v111 = vunpack.c.l.b16 %v37
  %v112 = vunpack.c.l.b16 %v38
  %v113 = vunpack.c.l.b16 %v39
  %v114 = vunpack.c.l.b16 %v40
  %v115 = vunpack.c.l.b16 %v41
  %v116 = vunpack.c.l.b16 %v42
  %v117 = vunpack.c.l.b16 %v43
  %v118 = vunpack.c.l.b16 %v44
  %v119 = vunpack.c.l.b16 %v45
  %v120 = vunpack.c.l.b16 %v46
  %v121 = vunpack.c.l.b16 %v47
  %v122 = vunpack.c.l.b16 %v48
  %v123 = vunpack.c.l.b16 %v49
  %v124 = vunpack.c.l.b16 %v50
  %v125 = vunpack.c.l.b16 %v51
  %v126 = vunpack.c.l.b16 %v52
  %v127 = vunpack.c.l.b16 %v53
  %v128 = vunpack.c.l.b16 %v54
  %v129 = vunpack.c.l.b16 %v55
  %v130 = vunpack.c.l.b16 %v56
  %v131 = vpack.c.b16 %v100, %v99
  %v132 = vpack.c.b16 %v102, %v101
  %v133 = vpack.c.b16 %v104, %v103
  %v134 = vpack.c.b16 %v106, %v105
  %v135 = vpack.c.b16 %v108, %v107
  %v136 = vpack.c.b16 %v110, %v109
  %v137 = vpack.c.b16 %v112, %v111
  %v138 = vpack.c.b16 %v114, %v113
  %v139 = vpack.c.b16 %v116, %v115
  %v140 = vpack.c.b16 %v118, %v117
  %v141 = vpack.c.b16 %v120, %v119
  %v142 = vpack.c.b16 %v122, %v121
  %v143 = vpack.c.b16 %v124, %v123
  %v144 = vpack.c.b16 %v126, %v125
  %v145 = vpack.c.b16 %v128, %v127
  %v146 = vpack.c.b16 %v130, %v129
  %163 = vmatprep.subr.bf16.mxu0 0
  %164 = vmatpush1.bf16.msra.mxu0 %v131
  %165 = vmatprep.subr.bf16.mxu0 0
  %166 = vmatpush1.bf16.msra.mxu0 %v132
  %167 = vmatprep.subr.bf16.mxu0 0
  %168 = vmatpush1.bf16.msra.mxu0 %v133
  %169 = vmatprep.subr.bf16.mxu0 0
  %170 = vmatpush1.bf16.msra.mxu0 %v134
  %171 = vmatprep.subr.bf16.mxu0 0
  %172 = vmatpush1.bf16.msra.mxu0 %v135
  %173 = vmatprep.subr.bf16.mxu0 0
  %174 = vmatpush1.bf16.msra.mxu0 %v136
  %175 = vmatprep.subr.bf16.mxu0 0
  %176 = vmatpush1.bf16.msra.mxu0 %v137
  %177 = vmatprep.subr.bf16.mxu0 0
  %178 = vmatpush1.bf16.msra.mxu0 %v138
  %179 = vmatprep.subr.bf16.mxu0 0
  %180 = vmatpush1.bf16.msra.mxu0 %v139
  %181 = vmatprep.subr.bf16.mxu0 0
  %182 = vmatpush1.bf16.msra.mxu0 %v140
  %183 = vmatprep.subr.bf16.mxu0 0
  %184 = vmatpush1.bf16.msra.mxu0 %v141
  %185 = vmatprep.subr.bf16.mxu0 0
  %186 = vmatpush1.bf16.msra.mxu0 %v142
  %187 = vmatprep.subr.bf16.mxu0 0
  %188 = vmatpush1.bf16.msra.mxu0 %v143
  %189 = vmatprep.subr.bf16.mxu0 0
  %190 = vmatpush1.bf16.msra.mxu0 %v144
  %191 = vmatprep.subr.bf16.mxu0 0
  %192 = vmatpush1.bf16.msra.mxu0 %v145
  %193 = vmatprep.subr.bf16.mxu0 0
  %194 = vmatpush1.bf16.msra.mxu0 %v146
  %195 = vmatprep.mubr.bf16.mxu0 %v64
  %196 = vmatmul.mubr.bf16.gmra.mrb[0].mxu0 %v63
  %v197 = vpop.f32.mrb[0].mxu0
  %v198 = vadd.f32 0.0, %v197
  %v199 = vpop.f32.mrb[0].mxu0
  %v200 = vpop.f32.mrb[0].mxu0
  %v201 = vadd.f32 0.0, %v200
  %v202 = vpop.f32.mrb[0].mxu0
  %203 = vdwg.mxu0
  %v204 = vadd.f32 %v21, %v198
  %v205 = vadd.f32 %v22, %v201
  %206 = vst [vmem:[#allocation2] sm:$0xff] %v204
  %207 = vst [vmem:[#allocation2 + $0x8] sm:$0xff] %v205
  // Predicated region
  $region18: #{_lambda_.5} parent=0 // pred_check
    %p208 = pneg %p15
  $region19: #{_lambda_.5} parent=0 // pred_check_branch
    %210 = sbr.rel (%p208) target = $region21
  $region20: #{_lambda_.5} parent=0 // pred_region
    %v211 = vld [vmem:[#allocation2] sm:$0xff]
    %v212 = vld [vmem:[#allocation2 + $0x8] sm:$0xff]
    %v213 = vld [vmem:[%s2] sm:$0x1]
    %v215 = vlaneseq
    %v216 = vshrl.u32 %v215, 7
    %v217 = vsub.s32 0, %v216
    %v218 = vrot.slane %v213, %v217
    %v220 = vadd.f32 %v211, %v218
    %v221 = vadd.f32 %v212, %v218
    %222 = vst [vmem:[%s3] sm:$0xff] %v220
    %223 = vst [vmem:[%s3 + $0x8] sm:$0xff] %v221
  $region21: #{_lambda_.5} parent=0 // pred_fallthru
    _
  // Predicated region
  $region22: #{_lambda_.5} parent=0 // pred_check
    _
  $region23: #{_lambda_.5} parent=0 // pred_check_branch
    %225 = sbr.rel (0) target = $region25
  $region24: #{_lambda_.5} parent=0 // pred_region
    _
  $region25: #{_lambda_.5} parent=0 // pred_fallthru
    _
  // Predicated region
  $region26: #{_lambda_.5} parent=0 // pred_check
    _
  $region27: #{_lambda_.5} parent=0 // pred_check_branch
    %227 = sbr.rel (0) target = $region29
  $region28: #{_lambda_.5} parent=0 // pred_region
    _
  $region29: #{_lambda_.5} parent=0 // pred_fallthru
    _

// kernel: _lambda_.4
$region0: #{_lambda_.4}
  #allocation0 [shape = 'u32[]', space=smem, size = 0x4, offset = 0x4, fixed_abs, tag = 'smem constant byte address 0x4 - core index']
  #allocation1 [shape = 'u32[144,128]{1,0:T(1,128)}', space=vmem, size = 0x12000, scoped, tag = 'internal scratch']
  #allocation2 [shape = 'f32[16,256]{1,0:T(8,128)}', space=vmem, size = 0x4000, scoped, tag = 'scratch operand']
  %s0 = inlined_call_operand.vmem [shape: bf16[16,256], index: 0, kind: input, shape index: {}]
  %s1 = inlined_call_operand.vmem [shape: bf16[256,256], index: 1, kind: input, shape index: {}]
  %s2 = inlined_call_operand.vmem [shape: f32[1,256], index: 2, kind: input, shape index: {}]
  %s3 = inlined_call_operand.vmem [shape: bf16[16,256], index: 3, kind: output, shape index: {}]
  %s4 = sld [smem:[#allocation0]]
  $region30: #{_lambda_.4} parent=0
    _
  %s6 = ssub.s32 1, %s4
  %s7 = scalar_select 0, %s6, %s4
  // Predicated region
  $region2: #{_lambda_.4} parent=0 // pred_check
    _
  $region3: #{_lambda_.4} parent=0 // pred_check_branch
    %9 = sbr.rel (0) target = $region5
  $region4: #{_lambda_.4} parent=0 // pred_region
    _
  $region5: #{_lambda_.4} parent=0 // pred_fallthru
    _
  // Predicated region
  $region6: #{_lambda_.4} parent=0 // pred_check
    _
  $region7: #{_lambda_.4} parent=0 // pred_check_branch
    %11 = sbr.rel (0) target = $region9
  $region8: #{_lambda_.4} parent=0 // pred_region
    _
  $region9: #{_lambda_.4} parent=0 // pred_fallthru
    _
  // Predicated region
  $region10: #{_lambda_.4} parent=0 // pred_check
    _
  $region11: #{_lambda_.4} parent=0 // pred_check_branch
    %13 = sbr.rel (0) target = $region13
  $region12: #{_lambda_.4} parent=0 // pred_region
    _
  $region13: #{_lambda_.4} parent=0 // pred_fallthru
    _
  %p14 = scmp.eq.s32.totalorder 0, 0
  // Predicated region
  $region14: #{_lambda_.4} parent=0 // pred_check
    %p15 = pneg %p14
  $region15: #{_lambda_.4} parent=0 // pred_check_branch
    %17 = sbr.rel (%p15) target = $region17
  $region16: #{_lambda_.4} parent=0 // pred_region
    %18 = vst [vmem:[#allocation2] sm:$0xff] 0.0
    %19 = vst [vmem:[#allocation2 + $0x8] sm:$0xff] 0.0
    %20 = vst [vmem:[#allocation2 + $0x10] sm:$0xff] 0.0
    %21 = vst [vmem:[#allocation2 + $0x18] sm:$0xff] 0.0
  $region17: #{_lambda_.4} parent=0 // pred_fallthru
    _
  %v22 = vld [vmem:[#allocation2] sm:$0xff]
  %v23 = vld [vmem:[#allocation2 + $0x8] sm:$0xff]
  %v24 = vld [vmem:[#allocation2 + $0x10] sm:$0xff]
  %v25 = vld [vmem:[#allocation2 + $0x18] sm:$0xff]
  %v26 = vld [vmem:[%s0] sm:$0xff]
  %v27 = vld [vmem:[%s0 + $0x8] sm:$0xff]
  %v28 = vld [vmem:[%s1] sm:$0xff]
  %v29 = vld [vmem:[%s1 + $0x8] sm:$0xff]
  %v30 = vld [vmem:[%s1 + $0x10] sm:$0xff]
  %v31 = vld [vmem:[%s1 + $0x18] sm:$0xff]
  %v32 = vld [vmem:[%s1 + $0x20] sm:$0xff]
  %v33 = vld [vmem:[%s1 + $0x28] sm:$0xff]
  %v34 = vld [vmem:[%s1 + $0x30] sm:$0xff]
  %v35 = vld [vmem:[%s1 + $0x38] sm:$0xff]
  %v36 = vld [vmem:[%s1 + $0x40] sm:$0xff]
  %v37 = vld [vmem:[%s1 + $0x48] sm:$0xff]
  %v38 = vld [vmem:[%s1 + $0x50] sm:$0xff]
  %v39 = vld [vmem:[%s1 + $0x58] sm:$0xff]
  %v40 = vld [vmem:[%s1 + $0x60] sm:$0xff]
  %v41 = vld [vmem:[%s1 + $0x68] sm:$0xff]
  %v42 = vld [vmem:[%s1 + $0x70] sm:$0xff]
  %v43 = vld [vmem:[%s1 + $0x78] sm:$0xff]
  %v44 = vld [vmem:[%s1 + $0x80] sm:$0xff]
  %v45 = vld [vmem:[%s1 + $0x88] sm:$0xff]
  %v46 = vld [vmem:[%s1 + $0x90] sm:$0xff]
  %v47 = vld [vmem:[%s1 + $0x98] sm:$0xff]
  %v48 = vld [vmem:[%s1 + $0xa0] sm:$0xff]
  %v49 = vld [vmem:[%s1 + $0xa8] sm:$0xff]
  %v50 = vld [vmem:[%s1 + $0xb0] sm:$0xff]
  %v51 = vld [vmem:[%s1 + $0xb8] sm:$0xff]
  %v52 = vld [vmem:[%s1 + $0xc0] sm:$0xff]
  %v53 = vld [vmem:[%s1 + $0xc8] sm:$0xff]
  %v54 = vld [vmem:[%s1 + $0xd0] sm:$0xff]
  %v55 = vld [vmem:[%s1 + $0xd8] sm:$0xff]
  %v56 = vld [vmem:[%s1 + $0xe0] sm:$0xff]
  %v57 = vld [vmem:[%s1 + $0xe8] sm:$0xff]
  %v58 = vld [vmem:[%s1 + $0xf0] sm:$0xff]
  %v59 = vld [vmem:[%s1 + $0xf8] sm:$0xff]
  %v62 = vunpack.c.l.b16 %v26
  %v63 = vunpack.c.h.b16 %v26
  %v64 = vunpack.c.l.b16 %v27
  %v65 = vunpack.c.h.b16 %v27
  %v66 = vpack.c.b16 %v64, %v62
  %v67 = vpack.c.b16 %v65, %v63
  %v102 = vunpack.c.l.b16 %v28
  %v103 = vunpack.c.h.b16 %v28
  %v104 = vunpack.c.l.b16 %v29
  %v105 = vunpack.c.h.b16 %v29
  %v106 = vunpack.c.l.b16 %v30
  %v107 = vunpack.c.h.b16 %v30
  %v108 = vunpack.c.l.b16 %v31
  %v109 = vunpack.c.h.b16 %v31
  %v110 = vunpack.c.l.b16 %v32
  %v111 = vunpack.c.h.b16 %v32
  %v112 = vunpack.c.l.b16 %v33
  %v113 = vunpack.c.h.b16 %v33
  %v114 = vunpack.c.l.b16 %v34
  %v115 = vunpack.c.h.b16 %v34
  %v116 = vunpack.c.l.b16 %v35
  %v117 = vunpack.c.h.b16 %v35
  %v118 = vunpack.c.l.b16 %v36
  %v119 = vunpack.c.h.b16 %v36
  %v120 = vunpack.c.l.b16 %v37
  %v121 = vunpack.c.h.b16 %v37
  %v122 = vunpack.c.l.b16 %v38
  %v123 = vunpack.c.h.b16 %v38
  %v124 = vunpack.c.l.b16 %v39
  %v125 = vunpack.c.h.b16 %v39
  %v126 = vunpack.c.l.b16 %v40
  %v127 = vunpack.c.h.b16 %v40
  %v128 = vunpack.c.l.b16 %v41
  %v129 = vunpack.c.h.b16 %v41
  %v130 = vunpack.c.l.b16 %v42
  %v131 = vunpack.c.h.b16 %v42
  %v132 = vunpack.c.l.b16 %v43
  %v133 = vunpack.c.h.b16 %v43
  %v134 = vunpack.c.l.b16 %v44
  %v135 = vunpack.c.h.b16 %v44
  %v136 = vunpack.c.l.b16 %v45
  %v137 = vunpack.c.h.b16 %v45
  %v138 = vunpack.c.l.b16 %v46
  %v139 = vunpack.c.h.b16 %v46
  %v140 = vunpack.c.l.b16 %v47
  %v141 = vunpack.c.h.b16 %v47
  %v142 = vunpack.c.l.b16 %v48
  %v143 = vunpack.c.h.b16 %v48
  %v144 = vunpack.c.l.b16 %v49
  %v145 = vunpack.c.h.b16 %v49
  %v146 = vunpack.c.l.b16 %v50
  %v147 = vunpack.c.h.b16 %v50
  %v148 = vunpack.c.l.b16 %v51
  %v149 = vunpack.c.h.b16 %v51
  %v150 = vunpack.c.l.b16 %v52
  %v151 = vunpack.c.h.b16 %v52
  %v152 = vunpack.c.l.b16 %v53
  %v153 = vunpack.c.h.b16 %v53
  %v154 = vunpack.c.l.b16 %v54
  %v155 = vunpack.c.h.b16 %v54
  %v156 = vunpack.c.l.b16 %v55
  %v157 = vunpack.c.h.b16 %v55
  %v158 = vunpack.c.l.b16 %v56
  %v159 = vunpack.c.h.b16 %v56
  %v160 = vunpack.c.l.b16 %v57
  %v161 = vunpack.c.h.b16 %v57
  %v162 = vunpack.c.l.b16 %v58
  %v163 = vunpack.c.h.b16 %v58
  %v164 = vunpack.c.l.b16 %v59
  %v165 = vunpack.c.h.b16 %v59
  %v166 = vpack.c.b16 %v104, %v102
  %v167 = vpack.c.b16 %v105, %v103
  %v168 = vpack.c.b16 %v108, %v106
  %v169 = vpack.c.b16 %v109, %v107
  %v170 = vpack.c.b16 %v112, %v110
  %v171 = vpack.c.b16 %v113, %v111
  %v172 = vpack.c.b16 %v116, %v114
  %v173 = vpack.c.b16 %v117, %v115
  %v174 = vpack.c.b16 %v120, %v118
  %v175 = vpack.c.b16 %v121, %v119
  %v176 = vpack.c.b16 %v124, %v122
  %v177 = vpack.c.b16 %v125, %v123
  %v178 = vpack.c.b16 %v128, %v126
  %v179 = vpack.c.b16 %v129, %v127
  %v180 = vpack.c.b16 %v132, %v130
  %v181 = vpack.c.b16 %v133, %v131
  %v182 = vpack.c.b16 %v136, %v134
  %v183 = vpack.c.b16 %v137, %v135
  %v184 = vpack.c.b16 %v140, %v138
  %v185 = vpack.c.b16 %v141, %v139
  %v186 = vpack.c.b16 %v144, %v142
  %v187 = vpack.c.b16 %v145, %v143
  %v188 = vpack.c.b16 %v148, %v146
  %v189 = vpack.c.b16 %v149, %v147
  %v190 = vpack.c.b16 %v152, %v150
  %v191 = vpack.c.b16 %v153, %v151
  %v192 = vpack.c.b16 %v156, %v154
  %v193 = vpack.c.b16 %v157, %v155
  %v194 = vpack.c.b16 %v160, %v158
  %v195 = vpack.c.b16 %v161, %v159
  %v196 = vpack.c.b16 %v164, %v162
  %v197 = vpack.c.b16 %v165, %v163
  %230 = vmatprep.subr.bf16.mxu0 %v167
  %231 = vmatpush1.bf16.msra.mxu0 %v166
  %232 = vmatprep.subr.bf16.mxu0 %v169
  %233 = vmatpush1.bf16.msra.mxu0 %v168
  %234 = vmatprep.subr.bf16.mxu0 %v171
  %235 = vmatpush1.bf16.msra.mxu0 %v170
  %236 = vmatprep.subr.bf16.mxu0 %v173
  %237 = vmatpush1.bf16.msra.mxu0 %v172
  %238 = vmatprep.subr.bf16.mxu0 %v175
  %239 = vmatpush1.bf16.msra.mxu0 %v174
  %240 = vmatprep.subr.bf16.mxu0 %v177
  %241 = vmatpush1.bf16.msra.mxu0 %v176
  %242 = vmatprep.subr.bf16.mxu0 %v179
  %243 = vmatpush1.bf16.msra.mxu0 %v178
  %244 = vmatprep.subr.bf16.mxu0 %v181
  %245 = vmatpush1.bf16.msra.mxu0 %v180
  %246 = vmatprep.subr.bf16.mxu0 %v183
  %247 = vmatpush1.bf16.msra.mxu0 %v182
  %248 = vmatprep.subr.bf16.mxu0 %v185
  %249 = vmatpush1.bf16.msra.mxu0 %v184
  %250 = vmatprep.subr.bf16.mxu0 %v187
  %251 = vmatpush1.bf16.msra.mxu0 %v186
  %252 = vmatprep.subr.bf16.mxu0 %v189
  %253 = vmatpush1.bf16.msra.mxu0 %v188
  %254 = vmatprep.subr.bf16.mxu0 %v191
  %255 = vmatpush1.bf16.msra.mxu0 %v190
  %256 = vmatprep.subr.bf16.mxu0 %v193
  %257 = vmatpush1.bf16.msra.mxu0 %v192
  %258 = vmatprep.subr.bf16.mxu0 %v195
  %259 = vmatpush1.bf16.msra.mxu0 %v194
  %260 = vmatprep.subr.bf16.mxu0 %v197
  %261 = vmatpush1.bf16.msra.mxu0 %v196
  %262 = vmatprep.mubr.bf16.mxu0 %v67
  %263 = vmatmul.mubr.bf16.gmra.mrb[0].mxu0 %v66
  %v264 = vpop.f32.mrb[0].mxu0
  %v265 = vadd.f32 0.0, %v264
  %v266 = vpop.f32.mrb[0].mxu0
  %v267 = vadd.f32 0.0, %v266
  %v268 = vpop.f32.mrb[0].mxu0
  %v269 = vadd.f32 0.0, %v268
  %v270 = vpop.f32.mrb[0].mxu0
  %v271 = vadd.f32 0.0, %v270
  %272 = vdwg.mxu0
  %v273 = vadd.f32 %v22, %v265
  %v274 = vadd.f32 %v23, %v267
  %v275 = vadd.f32 %v24, %v269
  %v276 = vadd.f32 %v25, %v271
  %277 = vst [vmem:[#allocation2] sm:$0xff] %v273
  %278 = vst [vmem:[#allocation2 + $0x8] sm:$0xff] %v274
  %279 = vst [vmem:[#allocation2 + $0x10] sm:$0xff] %v275
  %280 = vst [vmem:[#allocation2 + $0x18] sm:$0xff] %v276
  // Predicated region
  $region18: #{_lambda_.4} parent=0 // pred_check
    %p281 = pneg %p14
  $region19: #{_lambda_.4} parent=0 // pred_check_branch
    %283 = sbr.rel (%p281) target = $region21
  $region20: #{_lambda_.4} parent=0 // pred_region
    %v284 = vld [vmem:[#allocation2] sm:$0xff]
    %v285 = vld [vmem:[#allocation2 + $0x8] sm:$0xff]
    %v286 = vld [vmem:[#allocation2 + $0x10] sm:$0xff]
    %v287 = vld [vmem:[#allocation2 + $0x18] sm:$0xff]
    %v288 = vld [vmem:[%s2] sm:$0x3]
    %v290 = vlaneseq
    %v291 = vshrl.u32 %v290, 7
    %v292 = vsub.s32 0, %v291
    %v293 = vrot.slane %v288, %v292
    %v294 = vlaneseq
    %v295 = vshrl.u32 %v294, 7
    %v296 = vsub.s32 1, %v295
    %v297 = vrot.slane %v288, %v296
    %v300 = vadd.f32 %v284, %v293
    %v301 = vadd.f32 %v285, %v297
    %v302 = vadd.f32 %v286, %v293
    %v303 = vadd.f32 %v287, %v297
    %v304 = vmax.f32 %v300, 0.0
    %v305 = vmax.f32 %v301, 0.0
    %v306 = vmax.f32 %v302, 0.0
    %v307 = vmax.f32 %v303, 0.0
    %v308 = vpack.c.bf16 %v306, %v304
    %v309 = vpack.c.bf16 %v307, %v305
    %v312 = vunpack.c.l.b16 %v308
    %v313 = vunpack.c.l.b16 %v309
    %v314 = vunpack.c.h.b16 %v308
    %v315 = vunpack.c.h.b16 %v309
    %v316 = vpack.c.b16 %v313, %v312
    %v317 = vpack.c.b16 %v315, %v314
    %320 = vst [vmem:[%s3] sm:$0xff] %v316
    %321 = vst [vmem:[%s3 + $0x8] sm:$0xff] %v317
  $region21: #{_lambda_.4} parent=0 // pred_fallthru
    _
  // Predicated region
  $region22: #{_lambda_.4} parent=0 // pred_check
    _
  $region23: #{_lambda_.4} parent=0 // pred_check_branch
    %323 = sbr.rel (0) target = $region25
  $region24: #{_lambda_.4} parent=0 // pred_region
    _
  $region25: #{_lambda_.4} parent=0 // pred_fallthru
    _
  // Predicated region
  $region26: #{_lambda_.4} parent=0 // pred_check
    _
  $region27: #{_lambda_.4} parent=0 // pred_check_branch
    %325 = sbr.rel (0) target = $region29
  $region28: #{_lambda_.4} parent=0 // pred_region
    _
  $region29: #{_lambda_.4} parent=0 // pred_fallthru
    _

// kernel: _lambda_.3
$region0: #{_lambda_.3}
  #allocation0 [shape = 'u32[]', space=smem, size = 0x4, offset = 0x4, fixed_abs, tag = 'smem constant byte address 0x4 - core index']
  #allocation1 [shape = 'u32[144,128]{1,0:T(1,128)}', space=vmem, size = 0x12000, scoped, tag = 'internal scratch']
  #allocation2 [shape = 'f32[16,256]{1,0:T(8,128)}', space=vmem, size = 0x4000, scoped, tag = 'scratch operand']
  %s0 = inlined_call_operand.vmem [shape: bf16[16,512], index: 0, kind: input, shape index: {}]
  %s1 = inlined_call_operand.hbm [shape: bf16[512,256], index: 1, kind: input, shape index: {}]
  %s2 = inlined_call_operand.vmem [shape: f32[1,256], index: 2, kind: input, shape index: {}]
  %s3 = inlined_call_operand.vmem [shape: bf16[16,256], index: 3, kind: output, shape index: {}]
  %s4 = sld [smem:[#allocation0]]
  $region34: #{_lambda_.3} parent=0
    _
  %s6 = ssub.s32 1, %s4
  %s7 = scalar_select 0, %s6, %s4
  $region1: #{_lambda_.3} parent=0
    #allocation3 [shape = 'u8[262144]{0}', space=vmem, size = 0x40000, scoped, tag = 'input window, operand 1, single buffered']
    #allocation4 [shape = 's32[1]{0}', space=sflag, size = 0x4, scoped, tag = 'scoped memory for _lambda_.3']
    %8 = vsyncpa [#allocation4], 0
    // Predicated region
    $region2: #{_lambda_.3} parent=1 // pred_check
      _
    $region3: #{_lambda_.3} parent=1 // pred_check_branch
      %10 = sbr.rel (0) target = $region5
    $region4: #{_lambda_.3} parent=1 // pred_region
      _
    $region5: #{_lambda_.3} parent=1 // pred_fallthru
      _
    // Predicated region
    $region6: #{_lambda_.3} parent=1 // pred_check
      _
    $region7: #{_lambda_.3} parent=1 // pred_check_branch
      %12 = sbr.rel (0) target = $region9
    $region8: #{_lambda_.3} parent=1 // pred_region
      %s14 = ssub.s32 8192, 8192
      %15 = vsyncadd [#allocation4], %s14
      %s16 = sshll.u32 [#allocation3], 4
      %s17 = int_to_ptr.vmem [resolvable:$true] %s16
      %22 = dma.hbm_to_vmem [thread:$0]  %s1, 8192, %s17, [#allocation4], 128, 128, 8
    $region9: #{_lambda_.3} parent=1 // pred_fallthru
      _
    // Predicated region
    $region10: #{_lambda_.3} parent=1 // pred_check
      _
    $region11: #{_lambda_.3} parent=1 // pred_check_branch
      %24 = sbr.rel (0) target = $region13
    $region12: #{_lambda_.3} parent=1 // pred_region
      _
    $region13: #{_lambda_.3} parent=1 // pred_fallthru
      _
    // Predicated region
    $region14: #{_lambda_.3} parent=1 // pred_check
      _
    $region15: #{_lambda_.3} parent=1 // pred_check_branch
      %26 = sbr.rel (0) target = $region17
    $region16: #{_lambda_.3} parent=1 // pred_region
      %27 = dma.done [#allocation4], 8192
    $region17: #{_lambda_.3} parent=1 // pred_fallthru
      _
    %p28 = scmp.eq.s32.totalorder 0, 0
    // Predicated region
    $region18: #{_lambda_.3} parent=1 // pred_check
      %p29 = pneg %p28
    $region19: #{_lambda_.3} parent=1 // pred_check_branch
      %31 = sbr.rel (%p29) target = $region21
    $region20: #{_lambda_.3} parent=1 // pred_region
      %32 = vst [vmem:[#allocation2] sm:$0xff] 0.0
      %33 = vst [vmem:[#allocation2 + $0x8] sm:$0xff] 0.0
      %34 = vst [vmem:[#allocation2 + $0x10] sm:$0xff] 0.0
      %35 = vst [vmem:[#allocation2 + $0x18] sm:$0xff] 0.0
    $region21: #{_lambda_.3} parent=1 // pred_fallthru
      _
    %v36 = vld [vmem:[#allocation2] sm:$0xff]
    %v37 = vld [vmem:[#allocation2 + $0x8] sm:$0xff]
    %v38 = vld [vmem:[#allocation2 + $0x10] sm:$0xff]
    %v39 = vld [vmem:[#allocation2 + $0x18] sm:$0xff]
    %v40 = vld [vmem:[%s0] sm:$0xff]
    %v41 = vld [vmem:[%s0 + $0x8] sm:$0xff]
    %v42 = vld [vmem:[%s0 + $0x10] sm:$0xff]
    %v43 = vld [vmem:[%s0 + $0x18] sm:$0xff]
    %v44 = vld [vmem:[#allocation3] sm:$0xff]
    %v45 = vld [vmem:[#allocation3 + $0x8] sm:$0xff]
    %v46 = vld [vmem:[#allocation3 + $0x10] sm:$0xff]
    %v47 = vld [vmem:[#allocation3 + $0x18] sm:$0xff]
    %v48 = vld [vmem:[#allocation3 + $0x20] sm:$0xff]
    %v49 = vld [vmem:[#allocation3 + $0x28] sm:$0xff]
    %v50 = vld [vmem:[#allocation3 + $0x30] sm:$0xff]
    %v51 = vld [vmem:[#allocation3 + $0x38] sm:$0xff]
    %v52 = vld [vmem:[#allocation3 + $0x40] sm:$0xff]
    %v53 = vld [vmem:[#allocation3 + $0x48] sm:$0xff]
    %v54 = vld [vmem:[#allocation3 + $0x50] sm:$0xff]
    %v55 = vld [vmem:[#allocation3 + $0x58] sm:$0xff]
    %v56 = vld [vmem:[#allocation3 + $0x60] sm:$0xff]
    %v57 = vld [vmem:[#allocation3 + $0x68] sm:$0xff]
    %v58 = vld [vmem:[#allocation3 + $0x70] sm:$0xff]
    %v59 = vld [vmem:[#allocation3 + $0x78] sm:$0xff]
    %v60 = vld [vmem:[#allocation3 + $0x80] sm:$0xff]
    %v61 = vld [vmem:[#allocation3 + $0x88] sm:$0xff]
    %v62 = vld [vmem:[#allocation3 + $0x90] sm:$0xff]
    %v63 = vld [vmem:[#allocation3 + $0x98] sm:$0xff]
    %v64 = vld [vmem:[#allocation3 + $0xa0] sm:$0xff]
    %v65 = vld [vmem:[#allocation3 + $0xa8] sm:$0xff]
    %v66 = vld [vmem:[#allocation3 + $0xb0] sm:$0xff]
    %v67 = vld [vmem:[#allocation3 + $0xb8] sm:$0xff]
    %v68 = vld [vmem:[#allocation3 + $0xc0] sm:$0xff]
    %v69 = vld [vmem:[#allocation3 + $0xc8] sm:$0xff]
    %v70 = vld [vmem:[#allocation3 + $0xd0] sm:$0xff]
    %v71 = vld [vmem:[#allocation3 + $0xd8] sm:$0xff]
    %v72 = vld [vmem:[#allocation3 + $0xe0] sm:$0xff]
    %v73 = vld [vmem:[#allocation3 + $0xe8] sm:$0xff]
    %v74 = vld [vmem:[#allocation3 + $0xf0] sm:$0xff]
    %v75 = vld [vmem:[#allocation3 + $0xf8] sm:$0xff]
    %v76 = vld [vmem:[#allocation3 + $0x100] sm:$0xff]
    %v77 = vld [vmem:[#allocation3 + $0x108] sm:$0xff]
    %v78 = vld [vmem:[#allocation3 + $0x110] sm:$0xff]
    %v79 = vld [vmem:[#allocation3 + $0x118] sm:$0xff]
    %v80 = vld [vmem:[#allocation3 + $0x120] sm:$0xff]
    %v81 = vld [vmem:[#allocation3 + $0x128] sm:$0xff]
    %v82 = vld [vmem:[#allocation3 + $0x130] sm:$0xff]
    %v83 = vld [vmem:[#allocation3 + $0x138] sm:$0xff]
    %v84 = vld [vmem:[#allocation3 + $0x140] sm:$0xff]
    %v85 = vld [vmem:[#allocation3 + $0x148] sm:$0xff]
    %v86 = vld [vmem:[#allocation3 + $0x150] sm:$0xff]
    %v87 = vld [vmem:[#allocation3 + $0x158] sm:$0xff]
    %v88 = vld [vmem:[#allocation3 + $0x160] sm:$0xff]
    %v89 = vld [vmem:[#allocation3 + $0x168] sm:$0xff]
    %v90 = vld [vmem:[#allocation3 + $0x170] sm:$0xff]
    %v91 = vld [vmem:[#allocation3 + $0x178] sm:$0xff]
    %v92 = vld [vmem:[#allocation3 + $0x180] sm:$0xff]
    %v93 = vld [vmem:[#allocation3 + $0x188] sm:$0xff]
    %v94 = vld [vmem:[#allocation3 + $0x190] sm:$0xff]
    %v95 = vld [vmem:[#allocation3 + $0x198] sm:$0xff]
    %v96 = vld [vmem:[#allocation3 + $0x1a0] sm:$0xff]
    %v97 = vld [vmem:[#allocation3 + $0x1a8] sm:$0xff]
    %v98 = vld [vmem:[#allocation3 + $0x1b0] sm:$0xff]
    %v99 = vld [vmem:[#allocation3 + $0x1b8] sm:$0xff]
    %v100 = vld [vmem:[#allocation3 + $0x1c0] sm:$0xff]
    %v101 = vld [vmem:[#allocation3 + $0x1c8] sm:$0xff]
    %v102 = vld [vmem:[#allocation3 + $0x1d0] sm:$0xff]
    %v103 = vld [vmem:[#allocation3 + $0x1d8] sm:$0xff]
    %v104 = vld [vmem:[#allocation3 + $0x1e0] sm:$0xff]
    %v105 = vld [vmem:[#allocation3 + $0x1e8] sm:$0xff]
    %v106 = vld [vmem:[#allocation3 + $0x1f0] sm:$0xff]
    %v107 = vld [vmem:[#allocation3 + $0x1f8] sm:$0xff]
    %v112 = vunpack.c.l.b16 %v40
    %v113 = vunpack.c.h.b16 %v40
    %v114 = vunpack.c.l.b16 %v41
    %v115 = vunpack.c.h.b16 %v41
    %v116 = vunpack.c.l.b16 %v42
    %v117 = vunpack.c.h.b16 %v42
    %v118 = vunpack.c.l.b16 %v43
    %v119 = vunpack.c.h.b16 %v43
    %v120 = vpack.c.b16 %v116, %v112
    %v121 = vpack.c.b16 %v117, %v113
    %v122 = vpack.c.b16 %v118, %v114
    %v123 = vpack.c.b16 %v119, %v115
    %v192 = vunpack.c.l.b16 %v44
    %v193 = vunpack.c.h.b16 %v44
    %v194 = vunpack.c.l.b16 %v45
    %v195 = vunpack.c.h.b16 %v45
    %v196 = vunpack.c.l.b16 %v46
    %v197 = vunpack.c.h.b16 %v46
    %v198 = vunpack.c.l.b16 %v47
    %v199 = vunpack.c.h.b16 %v47
    %v200 = vunpack.c.l.b16 %v48
    %v201 = vunpack.c.h.b16 %v48
    %v202 = vunpack.c.l.b16 %v49
    %v203 = vunpack.c.h.b16 %v49
    %v204 = vunpack.c.l.b16 %v50
    %v205 = vunpack.c.h.b16 %v50
    %v206 = vunpack.c.l.b16 %v51
    %v207 = vunpack.c.h.b16 %v51
    %v208 = vunpack.c.l.b16 %v52
    %v209 = vunpack.c.h.b16 %v52
    %v210 = vunpack.c.l.b16 %v53
    %v211 = vunpack.c.h.b16 %v53
    %v212 = vunpack.c.l.b16 %v54
    %v213 = vunpack.c.h.b16 %v54
    %v214 = vunpack.c.l.b16 %v55
    %v215 = vunpack.c.h.b16 %v55
    %v216 = vunpack.c.l.b16 %v56
    %v217 = vunpack.c.h.b16 %v56
    %v218 = vunpack.c.l.b16 %v57
    %v219 = vunpack.c.h.b16 %v57
    %v220 = vunpack.c.l.b16 %v58
    %v221 = vunpack.c.h.b16 %v58
    %v222 = vunpack.c.l.b16 %v59
    %v223 = vunpack.c.h.b16 %v59
    %v224 = vunpack.c.l.b16 %v60
    %v225 = vunpack.c.h.b16 %v60
    %v226 = vunpack.c.l.b16 %v61
    %v227 = vunpack.c.h.b16 %v61
    %v228 = vunpack.c.l.b16 %v62
    %v229 = vunpack.c.h.b16 %v62
    %v230 = vunpack.c.l.b16 %v63
    %v231 = vunpack.c.h.b16 %v63
    %v232 = vunpack.c.l.b16 %v64
    %v233 = vunpack.c.h.b16 %v64
    %v234 = vunpack.c.l.b16 %v65
    %v235 = vunpack.c.h.b16 %v65
    %v236 = vunpack.c.l.b16 %v66
    %v237 = vunpack.c.h.b16 %v66
    %v238 = vunpack.c.l.b16 %v67
    %v239 = vunpack.c.h.b16 %v67
    %v240 = vunpack.c.l.b16 %v68
    %v241 = vunpack.c.h.b16 %v68
    %v242 = vunpack.c.l.b16 %v69
    %v243 = vunpack.c.h.b16 %v69
    %v244 = vunpack.c.l.b16 %v70
    %v245 = vunpack.c.h.b16 %v70
    %v246 = vunpack.c.l.b16 %v71
    %v247 = vunpack.c.h.b16 %v71
    %v248 = vunpack.c.l.b16 %v72
    %v249 = vunpack.c.h.b16 %v72
    %v250 = vunpack.c.l.b16 %v73
    %v251 = vunpack.c.h.b16 %v73
    %v252 = vunpack.c.l.b16 %v74
    %v253 = vunpack.c.h.b16 %v74
    %v254 = vunpack.c.l.b16 %v75
    %v255 = vunpack.c.h.b16 %v75
    %v256 = vunpack.c.l.b16 %v76
    %v257 = vunpack.c.h.b16 %v76
    %v258 = vunpack.c.l.b16 %v77
    %v259 = vunpack.c.h.b16 %v77
    %v260 = vunpack.c.l.b16 %v78
    %v261 = vunpack.c.h.b16 %v78
    %v262 = vunpack.c.l.b16 %v79
    %v263 = vunpack.c.h.b16 %v79
    %v264 = vunpack.c.l.b16 %v80
    %v265 = vunpack.c.h.b16 %v80
    %v266 = vunpack.c.l.b16 %v81
    %v267 = vunpack.c.h.b16 %v81
    %v268 = vunpack.c.l.b16 %v82
    %v269 = vunpack.c.h.b16 %v82
    %v270 = vunpack.c.l.b16 %v83
    %v271 = vunpack.c.h.b16 %v83
    %v272 = vunpack.c.l.b16 %v84
    %v273 = vunpack.c.h.b16 %v84
    %v274 = vunpack.c.l.b16 %v85
    %v275 = vunpack.c.h.b16 %v85
    %v276 = vunpack.c.l.b16 %v86
    %v277 = vunpack.c.h.b16 %v86
    %v278 = vunpack.c.l.b16 %v87
    %v279 = vunpack.c.h.b16 %v87
    %v280 = vunpack.c.l.b16 %v88
    %v281 = vunpack.c.h.b16 %v88
    %v282 = vunpack.c.l.b16 %v89
    %v283 = vunpack.c.h.b16 %v89
    %v284 = vunpack.c.l.b16 %v90
    %v285 = vunpack.c.h.b16 %v90
    %v286 = vunpack.c.l.b16 %v91
    %v287 = vunpack.c.h.b16 %v91
    %v288 = vunpack.c.l.b16 %v92
    %v289 = vunpack.c.h.b16 %v92
    %v290 = vunpack.c.l.b16 %v93
    %v291 = vunpack.c.h.b16 %v93
    %v292 = vunpack.c.l.b16 %v94
    %v293 = vunpack.c.h.b16 %v94
    %v294 = vunpack.c.l.b16 %v95
    %v295 = vunpack.c.h.b16 %v95
    %v296 = vunpack.c.l.b16 %v96
    %v297 = vunpack.c.h.b16 %v96
    %v298 = vunpack.c.l.b16 %v97
    %v299 = vunpack.c.h.b16 %v97
    %v300 = vunpack.c.l.b16 %v98
    %v301 = vunpack.c.h.b16 %v98
    %v302 = vunpack.c.l.b16 %v99
    %v303 = vunpack.c.h.b16 %v99
    %v304 = vunpack.c.l.b16 %v100
    %v305 = vunpack.c.h.b16 %v100
    %v306 = vunpack.c.l.b16 %v101
    %v307 = vunpack.c.h.b16 %v101
    %v308 = vunpack.c.l.b16 %v102
    %v309 = vunpack.c.h.b16 %v102
    %v310 = vunpack.c.l.b16 %v103
    %v311 = vunpack.c.h.b16 %v103
    %v312 = vunpack.c.l.b16 %v104
    %v313 = vunpack.c.h.b16 %v104
    %v314 = vunpack.c.l.b16 %v105
    %v315 = vunpack.c.h.b16 %v105
    %v316 = vunpack.c.l.b16 %v106
    %v317 = vunpack.c.h.b16 %v106
    %v318 = vunpack.c.l.b16 %v107
    %v319 = vunpack.c.h.b16 %v107
    %v320 = vpack.c.b16 %v194, %v192
    %v321 = vpack.c.b16 %v195, %v193
    %v322 = vpack.c.b16 %v198, %v196
    %v323 = vpack.c.b16 %v199, %v197
    %v324 = vpack.c.b16 %v202, %v200
    %v325 = vpack.c.b16 %v203, %v201
    %v326 = vpack.c.b16 %v206, %v204
    %v327 = vpack.c.b16 %v207, %v205
    %v328 = vpack.c.b16 %v210, %v208
    %v329 = vpack.c.b16 %v211, %v209
    %v330 = vpack.c.b16 %v214, %v212
    %v331 = vpack.c.b16 %v215, %v213
    %v332 = vpack.c.b16 %v218, %v216
    %v333 = vpack.c.b16 %v219, %v217
    %v334 = vpack.c.b16 %v222, %v220
    %v335 = vpack.c.b16 %v223, %v221
    %v336 = vpack.c.b16 %v226, %v224
    %v337 = vpack.c.b16 %v227, %v225
    %v338 = vpack.c.b16 %v230, %v228
    %v339 = vpack.c.b16 %v231, %v229
    %v340 = vpack.c.b16 %v234, %v232
    %v341 = vpack.c.b16 %v235, %v233
    %v342 = vpack.c.b16 %v238, %v236
    %v343 = vpack.c.b16 %v239, %v237
    %v344 = vpack.c.b16 %v242, %v240
    %v345 = vpack.c.b16 %v243, %v241
    %v346 = vpack.c.b16 %v246, %v244
    %v347 = vpack.c.b16 %v247, %v245
    %v348 = vpack.c.b16 %v250, %v248
    %v349 = vpack.c.b16 %v251, %v249
    %v350 = vpack.c.b16 %v254, %v252
    %v351 = vpack.c.b16 %v255, %v253
    %v352 = vpack.c.b16 %v258, %v256
    %v353 = vpack.c.b16 %v259, %v257
    %v354 = vpack.c.b16 %v262, %v260
    %v355 = vpack.c.b16 %v263, %v261
    %v356 = vpack.c.b16 %v266, %v264
    %v357 = vpack.c.b16 %v267, %v265
    %v358 = vpack.c.b16 %v270, %v268
    %v359 = vpack.c.b16 %v271, %v269
    %v360 = vpack.c.b16 %v274, %v272
    %v361 = vpack.c.b16 %v275, %v273
    %v362 = vpack.c.b16 %v278, %v276
    %v363 = vpack.c.b16 %v279, %v277
    %v364 = vpack.c.b16 %v282, %v280
    %v365 = vpack.c.b16 %v283, %v281
    %v366 = vpack.c.b16 %v286, %v284
    %v367 = vpack.c.b16 %v287, %v285
    %v368 = vpack.c.b16 %v290, %v288
    %v369 = vpack.c.b16 %v291, %v289
    %v370 = vpack.c.b16 %v294, %v292
    %v371 = vpack.c.b16 %v295, %v293
    %v372 = vpack.c.b16 %v298, %v296
    %v373 = vpack.c.b16 %v299, %v297
    %v374 = vpack.c.b16 %v302, %v300
    %v375 = vpack.c.b16 %v303, %v301
    %v376 = vpack.c.b16 %v306, %v304
    %v377 = vpack.c.b16 %v307, %v305
    %v378 = vpack.c.b16 %v310, %v308
    %v379 = vpack.c.b16 %v311, %v309
    %v380 = vpack.c.b16 %v314, %v312
    %v381 = vpack.c.b16 %v315, %v313
    %v382 = vpack.c.b16 %v318, %v316
    %v383 = vpack.c.b16 %v319, %v317
    %448 = vmatprep.subr.bf16.mxu0 %v321
    %449 = vmatpush1.bf16.msra.mxu0 %v320
    %450 = vmatprep.subr.bf16.mxu0 %v323
    %451 = vmatpush1.bf16.msra.mxu0 %v322
    %452 = vmatprep.subr.bf16.mxu0 %v325
    %453 = vmatpush1.bf16.msra.mxu0 %v324
    %454 = vmatprep.subr.bf16.mxu0 %v327
    %455 = vmatpush1.bf16.msra.mxu0 %v326
    %456 = vmatprep.subr.bf16.mxu0 %v329
    %457 = vmatpush1.bf16.msra.mxu0 %v328
    %458 = vmatprep.subr.bf16.mxu0 %v331
    %459 = vmatpush1.bf16.msra.mxu0 %v330
    %460 = vmatprep.subr.bf16.mxu0 %v333
    %461 = vmatpush1.bf16.msra.mxu0 %v332
    %462 = vmatprep.subr.bf16.mxu0 %v335
    %463 = vmatpush1.bf16.msra.mxu0 %v334
    %464 = vmatprep.subr.bf16.mxu0 %v337
    %465 = vmatpush1.bf16.msra.mxu0 %v336
    %466 = vmatprep.subr.bf16.mxu0 %v339
    %467 = vmatpush1.bf16.msra.mxu0 %v338
    %468 = vmatprep.subr.bf16.mxu0 %v341
    %469 = vmatpush1.bf16.msra.mxu0 %v340
    %470 = vmatprep.subr.bf16.mxu0 %v343
    %471 = vmatpush1.bf16.msra.mxu0 %v342
    %472 = vmatprep.subr.bf16.mxu0 %v345
    %473 = vmatpush1.bf16.msra.mxu0 %v344
    %474 = vmatprep.subr.bf16.mxu0 %v347
    %475 = vmatpush1.bf16.msra.mxu0 %v346
    %476 = vmatprep.subr.bf16.mxu0 %v349
    %477 = vmatpush1.bf16.msra.mxu0 %v348
    %478 = vmatprep.subr.bf16.mxu0 %v351
    %479 = vmatpush1.bf16.msra.mxu0 %v350
    %480 = vmatprep.mubr.bf16.mxu0 %v121
    %481 = vmatmul.mubr.bf16.gmra.mrb[0].mxu0 %v120
    %v482 = vpop.f32.mrb[0].mxu0
    %v483 = vadd.f32 0.0, %v482
    %v484 = vpop.f32.mrb[0].mxu0
    %v485 = vadd.f32 0.0, %v484
    %v486 = vpop.f32.mrb[0].mxu0
    %v487 = vadd.f32 0.0, %v486
    %v488 = vpop.f32.mrb[0].mxu0
    %v489 = vadd.f32 0.0, %v488
    %490 = vdwg.mxu0
    %491 = vmatprep.subr.bf16.mxu0 %v353
    %492 = vmatpush1.bf16.msra.mxu0 %v352
    %493 = vmatprep.subr.bf16.mxu0 %v355
    %494 = vmatpush1.bf16.msra.mxu0 %v354
    %495 = vmatprep.subr.bf16.mxu0 %v357
    %496 = vmatpush1.bf16.msra.mxu0 %v356
    %497 = vmatprep.subr.bf16.mxu0 %v359
    %498 = vmatpush1.bf16.msra.mxu0 %v358
    %499 = vmatprep.subr.bf16.mxu0 %v361
    %500 = vmatpush1.bf16.msra.mxu0 %v360
    %501 = vmatprep.subr.bf16.mxu0 %v363
    %502 = vmatpush1.bf16.msra.mxu0 %v362
    %503 = vmatprep.subr.bf16.mxu0 %v365
    %504 = vmatpush1.bf16.msra.mxu0 %v364
    %505 = vmatprep.subr.bf16.mxu0 %v367
    %506 = vmatpush1.bf16.msra.mxu0 %v366
    %507 = vmatprep.subr.bf16.mxu0 %v369
    %508 = vmatpush1.bf16.msra.mxu0 %v368
    %509 = vmatprep.subr.bf16.mxu0 %v371
    %510 = vmatpush1.bf16.msra.mxu0 %v370
    %511 = vmatprep.subr.bf16.mxu0 %v373
    %512 = vmatpush1.bf16.msra.mxu0 %v372
    %513 = vmatprep.subr.bf16.mxu0 %v375
    %514 = vmatpush1.bf16.msra.mxu0 %v374
    %515 = vmatprep.subr.bf16.mxu0 %v377
    %516 = vmatpush1.bf16.msra.mxu0 %v376
    %517 = vmatprep.subr.bf16.mxu0 %v379
    %518 = vmatpush1.bf16.msra.mxu0 %v378
    %519 = vmatprep.subr.bf16.mxu0 %v381
    %520 = vmatpush1.bf16.msra.mxu0 %v380
    %521 = vmatprep.subr.bf16.mxu0 %v383
    %522 = vmatpush1.bf16.msra.mxu0 %v382
    %523 = vmatprep.mubr.bf16.mxu0 %v123
    %524 = vmatmul.mubr.bf16.gmra.mrb[0].mxu0 %v122
    %v525 = vpop.f32.mrb[0].mxu0
    %v526 = vadd.f32 %v483, %v525
    %v527 = vpop.f32.mrb[0].mxu0
    %v528 = vadd.f32 %v485, %v527
    %v529 = vpop.f32.mrb[0].mxu0
    %v530 = vadd.f32 %v487, %v529
    %v531 = vpop.f32.mrb[0].mxu0
    %v532 = vadd.f32 %v489, %v531
    %533 = vdwg.mxu0
    %v534 = vadd.f32 %v36, %v526
    %v535 = vadd.f32 %v37, %v528
    %v536 = vadd.f32 %v38, %v530
    %v537 = vadd.f32 %v39, %v532
    %538 = vst [vmem:[#allocation2] sm:$0xff] %v534
    %539 = vst [vmem:[#allocation2 + $0x8] sm:$0xff] %v535
    %540 = vst [vmem:[#allocation2 + $0x10] sm:$0xff] %v536
    %541 = vst [vmem:[#allocation2 + $0x18] sm:$0xff] %v537
    // Predicated region
    $region22: #{_lambda_.3} parent=1 // pred_check
      %p542 = pneg %p28
    $region23: #{_lambda_.3} parent=1 // pred_check_branch
      %544 = sbr.rel (%p542) target = $region25
    $region24: #{_lambda_.3} parent=1 // pred_region
      %v545 = vld [vmem:[#allocation2] sm:$0xff]
      %v546 = vld [vmem:[#allocation2 + $0x8] sm:$0xff]
      %v547 = vld [vmem:[#allocation2 + $0x10] sm:$0xff]
      %v548 = vld [vmem:[#allocation2 + $0x18] sm:$0xff]
      %v549 = vld [vmem:[%s2] sm:$0x3]
      %v551 = vlaneseq
      %v552 = vshrl.u32 %v551, 7
      %v553 = vsub.s32 0, %v552
      %v554 = vrot.slane %v549, %v553
      %v555 = vlaneseq
      %v556 = vshrl.u32 %v555, 7
      %v557 = vsub.s32 1, %v556
      %v558 = vrot.slane %v549, %v557
      %v561 = vadd.f32 %v545, %v554
      %v562 = vadd.f32 %v546, %v558
      %v563 = vadd.f32 %v547, %v554
      %v564 = vadd.f32 %v548, %v558
      %v565 = vmax.f32 %v561, 0.0
      %v566 = vmax.f32 %v562, 0.0
      %v567 = vmax.f32 %v563, 0.0
      %v568 = vmax.f32 %v564, 0.0
      %v569 = vpack.c.bf16 %v567, %v565
      %v570 = vpack.c.bf16 %v568, %v566
      %v573 = vunpack.c.l.b16 %v569
      %v574 = vunpack.c.l.b16 %v570
      %v575 = vunpack.c.h.b16 %v569
      %v576 = vunpack.c.h.b16 %v570
      %v577 = vpack.c.b16 %v574, %v573
      %v578 = vpack.c.b16 %v576, %v575
      %581 = vst [vmem:[%s3] sm:$0xff] %v577
      %582 = vst [vmem:[%s3 + $0x8] sm:$0xff] %v578
    $region25: #{_lambda_.3} parent=1 // pred_fallthru
      _
    // Predicated region
    $region26: #{_lambda_.3} parent=1 // pred_check
      _
    $region27: #{_lambda_.3} parent=1 // pred_check_branch
      %584 = sbr.rel (0) target = $region29
    $region28: #{_lambda_.3} parent=1 // pred_region
      _
    $region29: #{_lambda_.3} parent=1 // pred_fallthru
      _
    // Predicated region
    $region30: #{_lambda_.3} parent=1 // pred_check
      _
    $region31: #{_lambda_.3} parent=1 // pred_check_branch
      %586 = sbr.rel (0) target = $region33
    $region32: #{_lambda_.3} parent=1 // pred_region
      _
    $region33: #{_lambda_.3} parent=1 // pred_fallthru
      _
    %587 = vsyncpa [#allocation4], 1

</llo_original>
